<compile_context>
chip_gen: v5e
topology: v5e:2x2
jax: 0.10.0
libtpu: 0.0.40
codegen_flags: <defaults>
</compile_context>

<pallas_src>
import jax
import jax.numpy as jnp
from jax.experimental import pallas as pl
from jax.experimental.pallas import tpu as pltpu


# ----------------------------- NLL streaming kernel ---------------------------------
def _nll_kernel(pred_ref, tgt_ref, gsum_ref):
    # Reset the resident per-(batch, chunk) accumulator at the start of the inner loop.
    @pl.when(pl.program_id(2) == 0)
    def _():
        gsum_ref[...] = jnp.zeros_like(gsum_ref)

    pred = pred_ref[0]                                   # (C, TN) stream dtype
    tgt = tgt_ref[0].astype(jnp.int32)                   # (1, TN) int32 (from int8/int32)
    C, TN = pred.shape
    cls_ids = jax.lax.broadcasted_iota(jnp.int32, (C, TN), 0)
    # One-hot gather as a single select in the stream dtype (zero literal typed so
    # jnp.where does not promote back to f32); the class-axis sum is exact because
    # exactly one element per lane column is non-zero.
    picked = jnp.where(cls_ids == tgt, pred, jnp.zeros((), dtype=pred.dtype))
    gsum_ref[0] += jnp.sum(picked, axis=0, keepdims=True).astype(jnp.float32)


# ------------------------- feature-transform regularizer ----------------------------
def _reg_kernel(fm_ref, ssq_ref):
    fm = fm_ref[0]                                       # (64, 64) f32
    prod = jax.lax.dot_general(fm, fm, (((1,), (1,)), ((), ())),   # F @ F^T on the MXU
                               preferred_element_type=jnp.float32)
    row = jax.lax.broadcasted_iota(jnp.int32, prod.shape, 0)
    col = jax.lax.broadcasted_iota(jnp.int32, prod.shape, 1)
    diff = jnp.where(row == col, prod - 1.0, prod)       # FF^T - I, no eye materialized,
    ssq = jnp.sum(diff * diff)                           # ssq >= 0 exactly (no NaN sqrt)
    ssq_ref[0] = jnp.broadcast_to(ssq, (1, 128))         # lane-dense store


# ------------------------------------ helpers ---------------------------------------
def _round_up(x, m):
    return ((x + m - 1) // m) * m


def _vmem_capacity_bytes():
    try:
        info = pltpu.get_tpu_info()
        for name in ("vmem_capacity_bytes", "vmem_size_bytes", "vmem_bytes"):
            v = getattr(info, name, None)
            if v:
                return int(v)
    except Exception:
        pass
    return 64 << 20  # conservative default (v7x per-TensorCore VMEM)


# ------------------------------------ wrapper ----------------------------------------
def get_segmentation_loss(pred_nchw, target, feature_matrix, scale=0.001,
                          stream_dtype=jnp.bfloat16):
    """pred_nchw: (B, C, H, W) log-probs; target: (B, H, W) int; feature_matrix: (B, 64, 64)."""
    B, C, H, W = pred_nchw.shape
    N = H * W

    # NOTE: ideally the producer (log_softmax) already emits `stream_dtype`; under jit
    # these casts fuse with it so the kernel streams half the HBM bytes.
    pred = pred_nchw.reshape(B, C, N).astype(stream_dtype)
    tgt_dtype = jnp.int8 if C <= 127 else jnp.int32      # narrower target stream
    tgt = target.reshape(B, 1, N).astype(tgt_dtype)
    fm = feature_matrix.astype(jnp.float32)

    # ---- generation-aware tile sizing (no artificial TN clamp) ----------------------
    itemsize = jnp.dtype(stream_dtype).itemsize
    tgt_itemsize = jnp.dtype(tgt_dtype).itemsize
    sub_pred = 32 // itemsize                            # sublane tile rows: f32->8, bf16->16
    sub_tgt = 32 // tgt_itemsize                         # i8->32, i32->8
    c_pad = _round_up(C, sub_pred)                       # VMEM-padded class rows

    vmem_cap = _vmem_capacity_bytes()
    if vmem_cap <= (64 << 20):                           # v7x: 64 MiB VMEM per TC
        stream_budget, limit_cap = 16 << 20, 32 << 20
    else:                                                # v5e / v6e: 128 MiB VMEM
        stream_budget, limit_cap = 32 << 20, 48 << 20

    # Per-lane VMEM bytes per pipeline buffer: pred tile + target tile + f32 output
    # block, with sublane padding included.
    per_lane = c_pad * itemsize + sub_tgt * tgt_itemsize + 8 * 4
    n_pad128 = _round_up(N, 128)
    tn = max(128, min((stream_budget // 2) // per_lane, n_pad128))
    tn = (tn // 128) * 128

    n_tiles = pl.cdiv(n_pad128, tn)
    n_outer = 2 if n_tiles >= 2 else 1                   # v7x megacore even when B == 1
    n_tiles = _round_up(n_tiles, n_outer)
    n_inner = n_tiles // n_outer
    n_total = n_tiles * tn

    # Pad the point axis: padded pred columns are 0 and padded targets are class 0, so
    # the selected value is the padded 0 -> contributes nothing to the NLL sum.
    if n_total != N:
        pred = jnp.pad(pred, ((0, 0), (0, 0), (0, n_total - N)))
        tgt = jnp.pad(tgt, ((0, 0), (0, 0), (0, n_total - N)))

    vmem_bytes = (2 * (c_pad * tn * itemsize + sub_tgt * tn * tgt_itemsize)
                  + 2 * 8 * tn * 4                       # double-buffered output block
                  + (2 << 20))                           # slack for internal scratch
    vmem_limit = int(min(limit_cap, max(4 << 20, vmem_bytes)))

    # ---- NLL partial sums (the HBM-bandwidth-bound part) -----------------------------
    gsum_out = pl.pallas_call(
        _nll_kernel,
        out_shape=jax.ShapeDtypeStruct((B * n_outer, 1, tn), jnp.float32),
        grid_spec=pltpu.PrefetchScalarGridSpec(
            num_scalar_prefetch=0,
            grid=(B, n_outer, n_inner),
            in_specs=[
                pl.BlockSpec((1, C, tn), lambda b, o, ni: (b, 0, o * n_inner + ni)),
                pl.BlockSpec((1, 1, tn), lambda b, o, ni: (b, 0, o * n_inner + ni)),
            ],
            out_specs=pl.BlockSpec((1, 1, tn), lambda b, o, ni: (b * n_outer + o, 0, 0)),
        ),
        compiler_params=pltpu.CompilerParams(
            dimension_semantics=("parallel", "parallel", "arbitrary"),
            vmem_limit_bytes=vmem_limit),
    )(pred, tgt)

    # ---- per-batch ||I - F F^T||_F^2 (tiny, runs once per batch element) -------------
    ssq_out = pl.pallas_call(
        _reg_kernel,
        out_shape=jax.ShapeDtypeStruct((B, 1, 128), jnp.float32),
        grid_spec=pltpu.PrefetchScalarGridSpec(
            num_scalar_prefetch=0,
            grid=(B,),
            in_specs=[pl.BlockSpec((1, 64, 64), lambda b: (b, 0, 0))],
            out_specs=pl.BlockSpec((1, 1, 128), lambda b: (b, 0, 0)),
        ),
        compiler_params=pltpu.CompilerParams(
            dimension_semantics=("parallel",)),
    )(fm)

    # ---- tiny finalization in plain JAX ----------------------------------------------
    nll = -jnp.sum(gsum_out) / jnp.float32(B * N)        # F.nll_loss mean reduction
    ssq = jnp.sum(ssq_out[:, 0, 0])                      # sum_b ||I - F_b F_b^T||_F^2
    frob = jnp.sqrt(ssq)                                 # torch.norm over the whole tensor
    reg = jnp.float32(scale) * (frob + frob) / jnp.float32(B)
    # TODO(synk): F.nll_loss ignore_index=-100 semantics are not handled; targets must
    # be in [0, C), matching the module's intended use.
    return (nll + reg).astype(jnp.float32)


# ------------------------------------ reference --------------------------------------
def _reference_loss(pred_nchw, target, feature_matrix, scale=0.001):
    B, C, H, W = pred_nchw.shape
    N = H * W
    pred = pred_nchw.reshape(B, C, N)
    tgt = target.reshape(B, N)
    picked = jnp.take_along_axis(pred, tgt[:, None, :], axis=1)   # (B, 1, N)
    nll = -jnp.mean(picked)
    eye = jnp.eye(64, dtype=jnp.float32)[None]
    diff = eye - jnp.einsum('bij,bkj->bik', feature_matrix, feature_matrix)
    frob = jnp.sqrt(jnp.sum(diff * diff))
    reg = scale * (frob + frob) / B
    return nll + reg


if __name__ == "__main__":
    key = jax.random.PRNGKey(0)
    k1, k2, k3 = jax.random.split(key, 3)

    B, C, H, W = 2, 4, 16, 16
    logits = jax.random.normal(k1, (B, C, H, W), dtype=jnp.float32)
    pred = jax.nn.log_softmax(logits, axis=1)                       # NLL expects log-probs
    target = jax.random.randint(k2, (B, H, W), 0, C, dtype=jnp.int32)
    feature_matrix = 0.1 * jax.random.normal(k3, (B, 64, 64), dtype=jnp.float32)

    ref = _reference_loss(pred, target, feature_matrix, scale=0.001)

    # Default path: bf16 streaming of pred, f32 accumulation -> ~1e-2 rel rounding.
    out = jax.block_until_ready(get_segmentation_loss(pred, target, feature_matrix,
                                                      scale=0.001))
    assert jnp.allclose(out, ref, rtol=2e-2, atol=2e-2), (out, ref)

    # f32 streaming path: tight tolerance against the reference.
    out_f32 = jax.block_until_ready(
        get_segmentation_loss(pred, target, feature_matrix, scale=0.001,
                              stream_dtype=jnp.float32))
    assert jnp.allclose(out_f32, ref, rtol=1e-5, atol=1e-5), (out_f32, ref)

    print("KERNEL_OK")
</pallas_src>

<mosaic_0001>
module attributes {stable_mosaic.version = 11 : i64} {
  func.func @_nll_kernel(%arg0: i32, %arg1: i32, %arg2: i32, %arg3: memref<1x4x256xbf16, #tpu.memory_space<vmem>>, %arg4: memref<1x1x256xi8, #tpu.memory_space<vmem>>, %arg5: memref<1x1x256xf32, #tpu.memory_space<vmem>>) attributes {dimension_semantics = [#tpu.dimension_semantics<parallel>, #tpu.dimension_semantics<parallel>, #tpu.dimension_semantics<arbitrary>], iteration_bounds = array<i64: 2, 1, 1>, scalar_prefetch = 0 : i64, scratch_operands = 0 : i64, tpu.core_type = #tpu.core_type<tc>, window_params = [{transform_indices = @transform_0, window_bounds = array<i64: 1, 4, 256>}, {transform_indices = @transform_1, window_bounds = array<i64: 1, 1, 256>}, {transform_indices = @transform_2, window_bounds = array<i64: 1, 1, 256>}]} {
    %c0_i32 = arith.constant 0 : i32
    %0 = arith.cmpi eq, %arg2, %c0_i32 : i32
    %1 = arith.extui %0 : i1 to i32
    %c0_i32_0 = arith.constant 0 : i32
    %2 = arith.cmpi ne, %1, %c0_i32_0 : i32
    scf.if %2 {
      %cst_13 = arith.constant 0.000000e+00 : f32
      %24 = vector.broadcast %cst_13 : f32 to vector<1x1x256xf32>
      %c0_14 = arith.constant 0 : index
      %c0_15 = arith.constant 0 : index
      %c0_16 = arith.constant 0 : index
      %25 = vector.load %arg5[%c0_14, %c0_15, %c0_16] : memref<1x1x256xf32, #tpu.memory_space<vmem>>, vector<1x1x256xf32>
      tpu.vector_store %arg5[%c0_14, %c0_15, %c0_16], %24 {strides = array<i32>} : memref<1x1x256xf32, #tpu.memory_space<vmem>>, vector<1x1x256xf32>,
    } else {
    }
    %c0 = arith.constant 0 : index
    %c0_1 = arith.constant 0 : index
    %c0_2 = arith.constant 0 : index
    %3 = vector.load %arg3[%c0, %c0_1, %c0_2] : memref<1x4x256xbf16, #tpu.memory_space<vmem>>, vector<1x4x256xbf16>
    %4 = vector.shape_cast %3 : vector<1x4x256xbf16> to vector<4x256xbf16>
    %c0_3 = arith.constant 0 : index
    %c0_4 = arith.constant 0 : index
    %c0_5 = arith.constant 0 : index
    %5 = vector.load %arg4[%c0_3, %c0_4, %c0_5] : memref<1x1x256xi8, #tpu.memory_space<vmem>>, vector<1x1x256xi8>
    %6 = vector.shape_cast %5 : vector<1x1x256xi8> to vector<1x256xi8>
    %7 = arith.extsi %6 : vector<1x256xi8> to vector<1x256xi32>
    %8 = tpu.iota {dimensions = array<i32: 0>} : vector<4x256xi32>
    %9 = vector.broadcast %7 : vector<1x256xi32> to vector<4x256xi32>
    %10 = arith.cmpi eq, %8, %9 : vector<4x256xi32>
    %cst = arith.constant 0.000000e+00 : bf16
    %11 = vector.broadcast %cst : bf16 to vector<4x256xbf16>
    %12 = arith.select %10, %4, %11 : vector<4x256xi1>, vector<4x256xbf16>
    %c0_6 = arith.constant 0 : index
    %c0_7 = arith.constant 0 : index
    %c0_8 = arith.constant 0 : index
    %13 = vector.load %arg5[%c0_6, %c0_7, %c0_8] : memref<1x1x256xf32, #tpu.memory_space<vmem>>, vector<1x1x256xf32>
    %14 = vector.shape_cast %13 : vector<1x1x256xf32> to vector<1x256xf32>
    %15 = arith.extf %12 : vector<4x256xbf16> to vector<4x256xf32>
    %cst_9 = arith.constant dense<0.000000e+00> : vector<256xf32>
    %16 = vector.multi_reduction <add>, %15, %cst_9 [0] : vector<4x256xf32> to vector<256xf32>
    %17 = vector.shape_cast %16 : vector<256xf32> to vector<1x256xf32>
    %18 = arith.truncf %17 : vector<1x256xf32> to vector<1x256xbf16>
    %19 = arith.extf %18 : vector<1x256xbf16> to vector<1x256xf32>
    %20 = arith.addf %14, %19 : vector<1x256xf32>
    %c0_10 = arith.constant 0 : index
    %c0_11 = arith.constant 0 : index
    %c0_12 = arith.constant 0 : index
    %21 = vector.load %arg5[%c0_10, %c0_11, %c0_12] : memref<1x1x256xf32, #tpu.memory_space<vmem>>, vector<1x1x256xf32>
    %22 = vector.shape_cast %21 : vector<1x1x256xf32> to vector<1x256xf32>
    %23 = vector.shape_cast %20 : vector<1x256xf32> to vector<1x1x256xf32>
    tpu.vector_store %arg5[%c0_10, %c0_11, %c0_12], %23 {strides = array<i32>} : memref<1x1x256xf32, #tpu.memory_space<vmem>>, vector<1x1x256xf32>,
    return
  }
  func.func @transform_0(%arg0: i32, %arg1: i32, %arg2: i32) -> (i32, i32, i32) {
    %c1_i32 = arith.constant 1 : i32
    %0 = arith.muli %arg1, %c1_i32 : i32
    %1 = arith.addi %0, %arg2 : i32
    %c0_i32 = arith.constant 0 : i32
    %c0_i32_0 = arith.constant 0 : i32
    return %arg0, %c0_i32, %1 : i32, i32, i32
  }
  func.func @transform_1(%arg0: i32, %arg1: i32, %arg2: i32) -> (i32, i32, i32) {
    %c1_i32 = arith.constant 1 : i32
    %0 = arith.muli %arg1, %c1_i32 : i32
    %1 = arith.addi %0, %arg2 : i32
    %c0_i32 = arith.constant 0 : i32
    %c0_i32_0 = arith.constant 0 : i32
    return %arg0, %c0_i32, %1 : i32, i32, i32
  }
  func.func @transform_2(%arg0: i32, %arg1: i32, %arg2: i32) -> (i32, i32, i32) {
    %c1_i32 = arith.constant 1 : i32
    %0 = arith.muli %arg0, %c1_i32 : i32
    %1 = arith.addi %0, %arg1 : i32
    %c0_i32 = arith.constant 0 : i32
    %c0_i32_0 = arith.constant 0 : i32
    %c0_i32_1 = arith.constant 0 : i32
    return %1, %c0_i32, %c0_i32_0 : i32, i32, i32
  }
}

</mosaic_0001>

<llo_original>
// kernel: tpu_custom_call.1
$region0: #{tpu_custom_call.1}
  #allocation0 [shape = 'u32[]', space=smem, size = 0x4, offset = 0x4, fixed_abs, tag = 'smem constant byte address 0x4 - core index']
  #allocation1 [shape = 'u32[72,128]{1,0:T(1,128)}', space=vmem, size = 0x9000, scoped, tag = 'internal scratch']
  %s0 = inlined_call_operand.hbm [shape: bf16[2,4,256], index: 0, kind: input, shape index: {}]
  %s1 = inlined_call_operand.vmem [shape: s8[2,1,256], index: 1, kind: input, shape index: {}]
  %s2 = inlined_call_operand.hbm [shape: f32[2,1,256], index: 2, kind: output, shape index: {}]
  %s3 = sld [smem:[#allocation0]]
  $region49: #{tpu_custom_call.1} parent=0
    _
  %s5 = ssub.s32 1, %s3
  %s6 = scalar_select 0, %s5, %s3
  $region1: #{tpu_custom_call.1} parent=0
    #allocation2 [shape = 'u8[4096]{0}', space=vmem, size = 0x1000, scoped, tag = 'input window, operand 0']
    #allocation3 [shape = 's32[2]{0}', space=sflag, size = 0x8, scoped, tag = 'scoped memory for tpu_custom_call.1']
    #allocation4 [shape = 's32[2]{0}', space=sflag, size = 0x8, scoped, tag = 'scoped memory for tpu_custom_call.1']
    #allocation5 [shape = 'u8[2048]{0}', space=vmem, size = 0x800, scoped, tag = 'output window, operand 0']
    %7 = vsyncpa [#allocation3], 0
    %s8 = scalar_lea.sflag [#allocation3], 1
    %9 = vsyncpa %s8, 0
    %10 = vsyncpa [#allocation4], 0
    %s11 = scalar_lea.sflag [#allocation4], 1
    %12 = vsyncpa %s11, 0
    loop: start=0, step=1, limit=4
    $region2: #{tpu_custom_call.1} parent=1 // loop_pre_header
      _
    $region3: #{tpu_custom_call.1} parent=1 // loop_header
      %s14 = sphi 0, %s18
      %p15 = scmp.ge.s32.totalorder %s14, 4
      %s21 = sphi 0, %s40
      %s22 = sphi 0, %s36
      %s23 = sphi 0, %s32
      %s24 = sphi 0, %s21
      %s25 = sphi 0, %s22
      %s26 = sphi 0, %s23
      %s27 = sphi 0, %s24
      %s28 = sphi 0, %s25
      %s29 = sphi 0, %s26
      %s47 = sphi 0, %s49
      %s50 = sphi 0, %s47
      %s51 = sphi 0, %s50
      %s67 = sphi 0, %s51
      %s77 = sphi 0, %s79
      %s80 = sphi 0, %s77
      %s81 = sphi 0, %s80
      %s97 = sphi 0, %s81
      %s105 = sphi 0, %s107
      %s108 = sphi 0, %s105
      %s109 = sphi 0, %s108
      %s125 = sphi 0, %s109
    $region4: #{tpu_custom_call.1} parent=1 // loop_header_branch
      %17 = sbr.rel (%p15) target = $region8
    $region5: #{tpu_custom_call.1} parent=1 // loop_body
      %s19 = ssub.s32 %s14, 1
      %s20 = ssub.s32 %s14, 2
      %s30 = sadd.s32 1, %s23
      %p31 = scmp.ge.s32.totalorder %s30, 1
      %s32 = scalar_select %p31, 0, %s30
      %s33 = sadd.s32 1, %s22
      %s34 = scalar_select %p31, %s33, %s22
      %p35 = scmp.ge.s32.totalorder %s34, 1
      %s36 = scalar_select %p35, 0, %s34
      %s37 = sadd.s32 1, %s21
      %s38 = scalar_select %p35, %s37, %s21
      %p39 = scmp.ge.s32.totalorder %s38, 2
      %s40 = scalar_select %p39, 0, %s38
      %s41 = sadd.s32 %s22, %s23
      %s42 = sadd.s32 %s36, %s32
      %s43 = ssub.s32 %s21, %s40
      %s44 = ssub.s32 %s41, %s42
      %s45 = sor.u32 %s43, %s44
      %p46 = scmp.eq.s32.totalorder %s45, 0
      %s48 = sadd.s32 %s47, 1
      %s49 = scalar_select %p46, %s47, %s48
      %p52 = pneg %p46
      %p53 = scmp.eq.s32.totalorder %s14, 1
      %p54 = por %p52, %p53
      %p55 = scmp.ne.s32.totalorder %s47, %s50
      %p56 = scmp.eq.s32.totalorder %s14, 0
      %p57 = por %p55, %p56
      %p58 = scmp.ne.s32.totalorder %s47, %s50
      %p59 = scmp.eq.s32.totalorder %s19, 1
      %p60 = por %p58, %p59
      %p61 = scmp.ne.s32.totalorder %s50, %s51
      %p62 = scmp.eq.s32.totalorder %s19, 0
      %p63 = por %p61, %p62
      %p64 = scmp.ne.s32.totalorder %s50, %s51
      %p65 = scmp.eq.s32.totalorder %s20, 1
      %p66 = por %p64, %p65
      %p68 = scmp.ne.s32.totalorder %s51, %s67
      %p69 = scmp.eq.s32.totalorder %s20, 0
      %p70 = por %p68, %p69
      %s71 = sadd.s32 %s22, %s23
      %s72 = sadd.s32 %s36, %s32
      %s73 = ssub.s32 %s21, %s40
      %s74 = ssub.s32 %s71, %s72
      %s75 = sor.u32 %s73, %s74
      %p76 = scmp.eq.s32.totalorder %s75, 0
      %s78 = sadd.s32 %s77, 1
      %s79 = scalar_select %p76, %s77, %s78
      %p82 = pneg %p76
      %p83 = scmp.eq.s32.totalorder %s14, 1
      %p84 = por %p82, %p83
      %p85 = scmp.ne.s32.totalorder %s77, %s80
      %p86 = scmp.eq.s32.totalorder %s14, 0
      %p87 = por %p85, %p86
      %p88 = scmp.ne.s32.totalorder %s77, %s80
      %p89 = scmp.eq.s32.totalorder %s19, 1
      %p90 = por %p88, %p89
      %p91 = scmp.ne.s32.totalorder %s80, %s81
      %p92 = scmp.eq.s32.totalorder %s19, 0
      %p93 = por %p91, %p92
      %p94 = scmp.ne.s32.totalorder %s80, %s81
      %p95 = scmp.eq.s32.totalorder %s20, 1
      %p96 = por %p94, %p95
      %p98 = scmp.ne.s32.totalorder %s81, %s97
      %p99 = scmp.eq.s32.totalorder %s20, 0
      %p100 = por %p98, %p99
      %s101 = sadd.s32 %s21, %s22
      %s102 = sadd.s32 %s40, %s36
      %s103 = ssub.s32 %s101, %s102
      %p104 = scmp.eq.s32.totalorder %s103, 0
      %s106 = sadd.s32 %s105, 1
      %s107 = scalar_select %p104, %s105, %s106
      %p110 = pneg %p104
      %p111 = scmp.eq.s32.totalorder %s14, 1
      %p112 = por %p110, %p111
      %p113 = scmp.ne.s32.totalorder %s105, %s108
      %p114 = scmp.eq.s32.totalorder %s14, 0
      %p115 = por %p113, %p114
      %p116 = scmp.ne.s32.totalorder %s105, %s108
      %p117 = scmp.eq.s32.totalorder %s19, 1
      %p118 = por %p116, %p117
      %p119 = scmp.ne.s32.totalorder %s108, %s109
      %p120 = scmp.eq.s32.totalorder %s19, 0
      %p121 = por %p119, %p120
      %p122 = scmp.ne.s32.totalorder %s108, %s109
      %p123 = scmp.eq.s32.totalorder %s20, 1
      %p124 = por %p122, %p123
      %p126 = scmp.ne.s32.totalorder %s109, %s125
      %p127 = scmp.eq.s32.totalorder %s20, 0
      %p128 = por %p126, %p127
      %p129 = scmp.le.s32.totalorder 1, %s14
      %p130 = scmp.lt.s32.totalorder %s14, 3
      %p131 = pnand %p129, %p130
      %p132 = pneg %p131
      // Predicated region
      $region9: #{tpu_custom_call.1} parent=5 // pred_check
        _
      $region10: #{tpu_custom_call.1} parent=5 // pred_check_branch
        %134 = sbr.rel (%p131) target = $region12
      $region11: #{tpu_custom_call.1} parent=5 // pred_region
        %s135 = ssub.s32 %s14, 1
      $region12: #{tpu_custom_call.1} parent=5 // pred_fallthru
        _
      %p136 = scmp.lt.s32.totalorder %s14, 2
      // Predicated region
      $region13: #{tpu_custom_call.1} parent=5 // pred_check
        %p137 = pneg %p136
      $region14: #{tpu_custom_call.1} parent=5 // pred_check_branch
        %139 = sbr.rel (%p137) target = $region16
      $region15: #{tpu_custom_call.1} parent=5 // pred_region
        // Predicated region
        $region17: #{tpu_custom_call.1} parent=15 // pred_check
          %p140 = pneg %p57
        $region18: #{tpu_custom_call.1} parent=15 // pred_check_branch
          %142 = sbr.rel (%p140) target = $region20
        $region19: #{tpu_custom_call.1} parent=15 // pred_region
          %s143 = sand.u32 %s47, 1
          %s144 = scalar_lea.sflag [#allocation3], %s143
          %s145 = sand.u32 %s47, 1
          %s146 = smul.addr %s145, 4
          %s147 = scalar_lea.vmem [#allocation2], %s146
          %s148 = sadd.s32 %s22, %s23
          %s149 = smul.u32 2, %s148
          %151 = vsyncadd %s144, 0
          %s152 = smul.addr %s21, 2
          %s153 = sadd.s32 %s149, %s152
          %s154 = smul.addr %s153, 2
          %s155 = scalar_lea.hbm %s0, %s154
          %s157 = sshll.u32 %s155, 4
          %s158 = int_to_ptr.hbm [resolvable:$true] %s157
          %s159 = sshll.u32 %s147, 4
          %s160 = int_to_ptr.vmem [resolvable:$true] %s159
          %162 = dma.hbm_to_vmem [thread:$0]  %s158, 64, %s160, %s144
        $region20: #{tpu_custom_call.1} parent=15 // pred_fallthru
          _
        // Predicated region
        $region21: #{tpu_custom_call.1} parent=15 // pred_check
          %p163 = pneg %p87
        $region22: #{tpu_custom_call.1} parent=15 // pred_check_branch
          %165 = sbr.rel (%p163) target = $region24
        $region23: #{tpu_custom_call.1} parent=15 // pred_region
          %s166 = sadd.s32 %s22, %s23
          %s167 = smul.u32 2, %s166
          %p168 = scmp.lt.s32.totalorder %s21, 1
          %s169 = scalar_select %p168, %s21, 1
          %p170 = scmp.lt.s32.totalorder %s167, 1
          %s171 = scalar_select %p170, %s167, 1
          %s172 = smul.addr %s169, 2
          %s173 = sadd.s32 %s171, %s172
          %s174 = scalar_lea.vmem %s1, %s173
          %s175 = sadd.s32 %s22, %s23
          %s176 = smul.u32 2, %s175
        $region24: #{tpu_custom_call.1} parent=15 // pred_fallthru
          _
      $region16: #{tpu_custom_call.1} parent=5 // pred_fallthru
        _
      %p177 = scmp.le.s32.totalorder 1, %s14
      %p178 = scmp.lt.s32.totalorder %s14, 3
      %p179 = pnand %p177, %p178
      %p180 = pneg %p179
      // Predicated region
      $region25: #{tpu_custom_call.1} parent=5 // pred_check
        _
      $region26: #{tpu_custom_call.1} parent=5 // pred_check_branch
        %182 = sbr.rel (%p179) target = $region28
      $region27: #{tpu_custom_call.1} parent=5 // pred_region
        %s183 = ssub.s32 %s14, 1
        %s184 = sand.u32 %s50, 1
        %s185 = scalar_lea.sflag [#allocation3], %s184
        %s186 = sand.u32 %s50, 1
        %s187 = smul.addr %s186, 4
        %s188 = scalar_lea.vmem [#allocation2], %s187
        // Predicated region
        $region29: #{tpu_custom_call.1} parent=27 // pred_check
          %p189 = pneg %p63
        $region30: #{tpu_custom_call.1} parent=27 // pred_check_branch
          %191 = sbr.rel (%p189) target = $region32
        $region31: #{tpu_custom_call.1} parent=27 // pred_region
          %193 = dma.done %s185, 64
        $region32: #{tpu_custom_call.1} parent=27 // pred_fallthru
          _
        %s194 = sand.u32 %s50, 1
        %s195 = scalar_lea.sflag [#allocation3], %s194
        %s196 = sand.u32 %s50, 1
        %s197 = smul.addr %s196, 4
        %s198 = scalar_lea.vmem [#allocation2], %s197
        %p199 = pneg %p63
        %p200 = pneg %p60
        %s201 = sadd.s32 %s25, %s26
        %s202 = smul.u32 2, %s201
        %p203 = scmp.lt.s32.totalorder %s24, 1
        %s204 = scalar_select %p203, %s24, 1
        %p205 = scmp.lt.s32.totalorder %s202, 1
        %s206 = scalar_select %p205, %s202, 1
        %s207 = smul.addr %s204, 2
        %s208 = sadd.s32 %s206, %s207
        %s209 = scalar_lea.vmem %s1, %s208
        %p210 = pneg %p93
        %p211 = pneg %p90
        %p212 = pneg %p121
        %p213 = pneg %p118
        %s214 = sand.u32 %s108, 1
        %s215 = scalar_lea.sflag [#allocation4], %s214
        %s216 = sand.u32 %s108, 1
        %s217 = smul.addr %s216, 2
        %s218 = scalar_lea.vmem [#allocation5], %s217
        %s219 = sadd.s32 %s25, %s26
        %s220 = smul.u32 2, %s219
        %s221 = sadd.s32 %s25, %s26
        %s222 = smul.u32 2, %s221
        %p223 = scmp.lt.s32.totalorder %s24, 1
        %s224 = scalar_select %p223, %s24, 1
        %p225 = scmp.lt.s32.totalorder %s222, 1
        %s226 = scalar_select %p225, %s222, 1
        %s227 = smul.addr %s224, 2
        %s228 = sadd.s32 %s226, %s227
        %s229 = scalar_lea.vmem %s1, %s228
        %s230 = sadd.s32 %s25, %s26
        %s231 = smul.u32 2, %s230
        %s232 = sadd.s32 %s24, %s25
        %p235 = scmp.eq.s32.totalorder %s26, 0
        // Predicated region
        $region33: #{tpu_custom_call.1} parent=27 // pred_check
          %p236 = pneg %p235
        $region34: #{tpu_custom_call.1} parent=27 // pred_check_branch
          %238 = sbr.rel (%p236) target = $region36
        $region35: #{tpu_custom_call.1} parent=27 // pred_region
          %v239 = vlaneseq
          %vm240 = vcmp.ge.s32.totalorder %v239, 0
          %vm241 = vcmp.lt.s32.totalorder %v239, 256
          %vm242 = vmand %vm240, %vm241
          %243 = vst.msk [vmem:[%s218] sm:$0x3] %vm242, 0.0
        $region36: #{tpu_custom_call.1} parent=27 // pred_fallthru
          _
        %v244 = vld [vmem:[%s188] sm:$0xf]
        %v245 = vld [vmem:[%s229] sm:$0x3]
        %v246 = vunpack.c.0.s8 %v245
        %v247 = vlaneseq
        %v248 = vshrl.u32 %v247, 7
        %v249 = vperm.slane %v246, 0
        %v250 = vperm.slane %v246, 4
        %v251 = vperm.slane %v249, 0
        %v252 = vperm.slane %v250, 0
        %vm253 = vcmp.eq.s32.totalorder %v248, %v251
        %vm254 = vcmp.eq.s32.totalorder %v248, %v252
        %v255 = vsel %vm253, 1, 0
        %v256 = vsel %vm254, 1, 0
        %v257 = vrot.slane %v256, 4
        %vm258 = vcmask 1043456
        %v259 = vsel %vm258, %v255, %v257
        %vm260 = vcmp.ne.s32.totalorder %v259, 0
        %v261 = vsel %vm260, 1, 0
        %v262 = vpack.c.b16 %v261, %v261
        %v263 = vunpack.c.l.b16 %v262
        %v264 = vunpack.c.h.b16 %v262
        %v265 = vunpack.c.l.b16 0
        %v266 = vunpack.c.h.b16 0
        %vm267 = vcmp.ne.s32.totalorder %v263, %v265
        %vm268 = vcmp.ne.s32.totalorder %v264, %v266
        %vm269 = vmpackc.low %vm268, %vm267
        %v270 = vsel %vm269, %v244, 0
        %v271 = vld [vmem:[%s218] sm:$0x3]
        %v272 = vunpack.c.l.bf16 %v270
        %274 = vst [vmem:[#allocation1] ss:$2 sm:$0xff] %v272
        %v275 = vld.sshfl [vmem:[#allocation1] sm:$0xff pattern:$0x75316420]
        %v276 = vld.sshfl [vmem:[#allocation1 + $0x8] sm:$0xff pattern:$0x75316420]
        %v279 = vsel %vm258, %v275, 0.0
        %v280 = vrot.slane %v279, 4
        %v281 = vadd.f32 %v279, %v280
        %v282 = vrot.slane %v281, 2
        %v283 = vadd.f32 %v281, %v282
        %v284 = vrot.slane %v283, 1
        %v285 = vadd.f32 %v283, %v284
        %v286 = vsel %vm258, %v276, 0.0
        %v287 = vrot.slane %v286, 4
        %v288 = vadd.f32 %v286, %v287
        %v289 = vrot.slane %v288, 2
        %v290 = vadd.f32 %v288, %v289
        %v291 = vrot.slane %v290, 1
        %v292 = vadd.f32 %v290, %v291
        %v293 = vpack.c.bf16 %v292, %v285
        %v294 = vunpack.c.l.bf16 %v293
        %v295 = vunpack.c.h.bf16 %v293
        %v298 = vrot.slane %v295, 7
        %vm299 = vcmask 1040384
        %v300 = vsel %vm299, %v294, %v298
        %v302 = vadd.f32 %v271, %v300
        %v303 = vlaneseq
        %vm304 = vcmp.ge.s32.totalorder %v303, 0
        %vm305 = vcmp.lt.s32.totalorder %v303, 256
        %vm306 = vmand %vm304, %vm305
        %307 = vst.msk [vmem:[%s218] sm:$0x3] %vm306, %v302
        %s308 = sand.u32 %s108, 1
        %s309 = scalar_lea.sflag [#allocation4], %s308
        %s310 = sand.u32 %s108, 1
        %s311 = smul.addr %s310, 2
        %s312 = scalar_lea.vmem [#allocation5], %s311
        // Predicated region
        $region37: #{tpu_custom_call.1} parent=27 // pred_check
          %p313 = pneg %p118
        $region38: #{tpu_custom_call.1} parent=27 // pred_check_branch
          %315 = sbr.rel (%p313) target = $region40
        $region39: #{tpu_custom_call.1} parent=27 // pred_region
          %s316 = sadd.s32 %s24, %s25
          %318 = vsyncadd %s309, 0
          %s319 = smul.addr %s316, 2
          %s320 = scalar_lea.hbm %s2, %s319
          %s322 = sshll.u32 %s312, 4
          %s323 = int_to_ptr.vmem [resolvable:$true] %s322
          %s324 = sshll.u32 %s320, 4
          %s325 = int_to_ptr.hbm [resolvable:$true] %s324
          %327 = dma.vmem_to_hbm [thread:$0]  %s323, 32, %s325, %s309
        $region40: #{tpu_custom_call.1} parent=27 // pred_fallthru
          _
      $region28: #{tpu_custom_call.1} parent=5 // pred_fallthru
        _
      %p328 = scmp.le.s32.totalorder 2, %s14
      // Predicated region
      $region41: #{tpu_custom_call.1} parent=5 // pred_check
        %p329 = pneg %p328
      $region42: #{tpu_custom_call.1} parent=5 // pred_check_branch
        %331 = sbr.rel (%p329) target = $region44
      $region43: #{tpu_custom_call.1} parent=5 // pred_region
        %s332 = ssub.s32 %s14, 2
        // Predicated region
        $region45: #{tpu_custom_call.1} parent=43 // pred_check
          %p333 = pneg %p124
        $region46: #{tpu_custom_call.1} parent=43 // pred_check_branch
          %335 = sbr.rel (%p333) target = $region48
        $region47: #{tpu_custom_call.1} parent=43 // pred_region
          %s336 = sand.u32 %s109, 1
          %s337 = scalar_lea.sflag [#allocation4], %s336
          %s338 = sand.u32 %s109, 1
          %s339 = smul.addr %s338, 2
          %s340 = scalar_lea.vmem [#allocation5], %s339
          %342 = dma.done %s337, 32
        $region48: #{tpu_custom_call.1} parent=43 // pred_fallthru
          _
      $region44: #{tpu_custom_call.1} parent=5 // pred_fallthru
        _
    $region6: #{tpu_custom_call.1} parent=1 // loop_footer
      %s18 = sadd.s32 1, %s14
    $region7: #{tpu_custom_call.1} parent=1 // loop_footer_branch
      %13 = sbr.rel target = $region3
    $region8: #{tpu_custom_call.1} parent=1 // loop_exit
      _
    %343 = vsyncpa [#allocation3], 1
    %s344 = scalar_lea.sflag [#allocation3], 1
    %345 = vsyncpa %s344, 1
    %346 = vsyncpa [#allocation4], 1
    %s347 = scalar_lea.sflag [#allocation4], 1
    %348 = vsyncpa %s347, 1

</llo_original>
